<compile_context>
chip_gen: v7x
topology: tpu7x:2x2x1
jax: 0.10.0
libtpu: 0.0.40
codegen_flags: <defaults>
</compile_context>

<pallas_src>
import functools

import numpy as np
import jax
import jax.numpy as jnp
from jax import lax
from jax.experimental import pallas as pl
from jax.experimental.pallas import tpu as pltpu

_MIB = 1024 * 1024


def conditioned_attn_kernel(gh_ref, enc_ref, we_ref, sv_ref, out_ref, *, matmul_dtype):
    # Block shapes seen here:
    #   gh_ref : (1, 1, H)       f32   (gh @ Wg^T + bias, precomputed per batch row)
    #   enc_ref: (1, tile_t, H)  caller dtype (f32 or bf16), streamed
    #   we_ref : (H, H)          matmul_dtype (resident We^T)
    #   sv_ref : (1, 1, H)       f32   (learned v, or condition_hidden row)
    #   out_ref: (1, 1, tile_t)  f32
    enc = enc_ref[0]                                   # (tile_t, H) 2D view, no reshape
    # In-kernel cast right before the MXU dot: no wrapper-side bf16 materialization,
    # so encoder_outputs is read from HBM exactly once.  No-op if caller already bf16.
    lhs = enc.astype(matmul_dtype)
    proj = jnp.dot(lhs, we_ref[...], preferred_element_type=jnp.float32)   # (tile_t, H)
    # Bias + gh projection folded in the wrapper -> single broadcast add, then EUP tanh.
    energy = jnp.tanh(proj + gh_ref[0])                                    # (tile_t, H) f32
    # score_vec . energy^T on the MXU -> lane-dense (1, tile_t) row (unmasked store path).
    out_ref[0] = lax.dot_general(
        sv_ref[0], energy,
        dimension_numbers=(((1,), (1,)), ((), ())),
        preferred_element_type=jnp.float32,
    )                                                                      # (1, tile_t)


def _physical_vmem_bytes() -> int:
    try:
        return int(pltpu.get_tpu_info().vmem_capacity_bytes)
    except Exception:
        return 64 * _MIB          # v7x per-TensorCore VMEM = the smallest across v5e/v6e/v7x


def _round_down(x, m):
    return (x // m) * m


def _round_up(x, m):
    return -(-x // m) * m


def _pick_tile_t(T, H, B, enc_elem_bytes, vmem_bytes):
    """Rows of encoder_outputs per grid step, sized by bytes (not a fixed row count).

    Target ~vmem/16 per enc tile (4 MiB on v7x's 64 MiB, 8 MiB on v5e/v6e's 128 MiB) so
    double-buffered enc tiles amortize the ~0.35us/step overhead while staying far below
    the per-chip VMEM ceiling.  Multiples of 128 keep output stores lane-dense.
    """
    target_bytes = min(max(vmem_bytes // 16, 2 * _MIB), 8 * _MIB)
    rows = max(target_bytes // (H * enc_elem_bytes), 128)
    if T <= rows:
        tile_t = T                                      # whole-T block
    else:
        tile_t = max(_round_down(rows, 128), 128)
    # Megacore occupancy (v7x has 2 TCs): keep at least 2 grid steps when B == 1.
    if B * pl.cdiv(T, tile_t) < 2 and T >= 256:
        tile_t = max(128, _round_up(pl.cdiv(T, 2), 128))
    return tile_t


def conditioned_attn(graph_hidden, condition_hidden, encoder_outputs, params, *,
                     using_emb_action_as_v=False, matmul_dtype=jnp.bfloat16, tile_t=None):
    """graph_hidden (B,H), condition_hidden (B,H), encoder_outputs (B,T,H),
    params = {attn_w (H,2H), attn_b (H,), [v (H,)]} -> (B,T).

    If tile_t is given and < T it must be a multiple of 128."""
    B, T, H = encoder_outputs.shape
    W = params["attn_w"].astype(jnp.float32)           # (H, 2H) torch nn.Linear layout
    b = params["attn_b"].astype(jnp.float32)           # (H,)

    # Small per-batch projection + bias fold, done once in XLA (cheap layout plumbing):
    #   gh_bias[b, :] = graph_hidden[b] @ W[:, :H]^T + b
    gh_bias = (
        jnp.dot(graph_hidden.astype(jnp.float32), W[:, :H].T,
                precision=lax.Precision.HIGHEST)
        + b
    ).reshape(B, 1, H)                                   # (B, 1, H) f32

    # Score vector: learned v (batch-invariant) or condition_hidden (per batch row).
    if using_emb_action_as_v:
        score_vec = condition_hidden.astype(jnp.float32).reshape(B, 1, H)
        sv_index_map = lambda bi, ti: (bi, 0, 0)
    else:
        score_vec = params["v"].astype(jnp.float32).reshape(1, 1, H)
        sv_index_map = lambda bi, ti: (0, 0, 0)

    we_t = W[:, H:].T.astype(matmul_dtype)               # (H, H): enc @ we_t == enc @ We^T
    enc = encoder_outputs                                 # streamed in caller dtype (no cast)
    enc_elem_bytes = jnp.dtype(enc.dtype).itemsize
    we_bytes = H * H * jnp.dtype(matmul_dtype).itemsize

    vmem_bytes = _physical_vmem_bytes()
    if tile_t is None:
        tile_t = _pick_tile_t(T, H, B, enc_elem_bytes, vmem_bytes)
    tile_t = min(int(tile_t), T)
    grid = (B, pl.cdiv(T, tile_t))                        # ragged last T-block is clipped

    # Resident weight: single-buffer it once it is big enough to matter (saves e.g. 8 MiB
    # at H=2048 bf16 -- the headroom that lets big enc tiles fit v7x's 64 MiB VMEM).
    we_single_buffer = we_bytes > 2 * _MIB
    we_spec_kwargs = dict(pipeline_mode=pl.Buffered(1)) if we_single_buffer else {}

    # Explicit VMEM budget: enc double buffer + weight buffer(s) + small blocks + slack.
    budget = (2 * tile_t * H * enc_elem_bytes
              + (1 if we_single_buffer else 2) * we_bytes
              + 4 * H * 4                    # gh_bias + score_vec (double-buffered, tiny)
              + 2 * tile_t * 4)              # output blocks
    vmem_limit = int(min(max(budget * 5 // 4 + 4 * _MIB, 32 * _MIB),
                         vmem_bytes * 3 // 4))

    kernel = functools.partial(conditioned_attn_kernel, matmul_dtype=matmul_dtype)

    out = pl.pallas_call(
        kernel,
        out_shape=jax.ShapeDtypeStruct((B, 1, T), jnp.float32),
        grid=grid,
        in_specs=[
            pl.BlockSpec((1, 1, H), lambda bi, ti: (bi, 0, 0)),            # gh_bias (per-b)
            pl.BlockSpec((1, tile_t, H), lambda bi, ti: (bi, ti, 0)),       # enc (streamed)
            pl.BlockSpec((H, H), lambda bi, ti: (0, 0), **we_spec_kwargs),  # We^T (resident)
            pl.BlockSpec((1, 1, H), sv_index_map),                          # score vector
        ],
        out_specs=pl.BlockSpec((1, 1, tile_t), lambda bi, ti: (bi, 0, ti)),
        compiler_params=pltpu.CompilerParams(
            dimension_semantics=("parallel", "parallel"),   # megacore sharding on v7x
            vmem_limit_bytes=vmem_limit,
        ),
    )(gh_bias, enc, we_t, score_vec)

    return out.reshape(B, T)                              # free reshape in the wrapper


def conditioned_attn_ref(graph_hidden, condition_hidden, encoder_outputs, params,
                         using_emb_action_as_v=False):
    """Pure-JAX f32 reference mirroring the PyTorch forward (concat + Linear + tanh + bmm)."""
    B, T, H = encoder_outputs.shape
    gh_rep = jnp.broadcast_to(graph_hidden[:, None, :], (B, T, H))
    cat = jnp.concatenate([gh_rep, encoder_outputs], axis=2)               # (B, T, 2H)
    energy = jnp.tanh(
        jnp.einsum("btk,hk->bth", cat, params["attn_w"],
                   precision=lax.Precision.HIGHEST)
        + params["attn_b"]
    )                                                                       # (B, T, H)
    if using_emb_action_as_v:
        return jnp.einsum("bth,bh->bt", energy, condition_hidden,
                          precision=lax.Precision.HIGHEST)
    return jnp.einsum("bth,h->bt", energy, params["v"],
                      precision=lax.Precision.HIGHEST)                      # (B, T)


def _make_inputs(B, T, H, key):
    k_gh, k_cond, k_enc, k_v, k_w, k_b = jax.random.split(key, 6)
    graph_hidden = jax.random.normal(k_gh, (B, H), jnp.float32)
    condition_hidden = jax.random.normal(k_cond, (B, H), jnp.float32)
    encoder_outputs = jax.random.normal(k_enc, (B, T, H), jnp.float32)
    stdv = 1.0 / np.sqrt(H)          # matches torch init scale for v
    bound = 1.0 / np.sqrt(2 * H)     # nn.Linear(2H, H) default init bound
    params = {
        "v": stdv * jax.random.normal(k_v, (H,), jnp.float32),
        "attn_w": jax.random.uniform(k_w, (H, 2 * H), jnp.float32, -bound, bound),
        "attn_b": jax.random.uniform(k_b, (H,), jnp.float32, -bound, bound),
    }
    return graph_hidden, condition_hidden, encoder_outputs, params


if __name__ == "__main__":
    key0, key1 = jax.random.split(jax.random.PRNGKey(0))

    # 1) Module-default branch (learned v) at small shapes.
    B, T, H = 2, 8, 32
    gh, cond, enc, params = _make_inputs(B, T, H, key0)
    out = jax.block_until_ready(jax.jit(conditioned_attn)(gh, cond, enc, params))
    ref = conditioned_attn_ref(gh, cond, enc, params)
    assert out.shape == (B, T)
    # Tolerance covers the bf16 cast of the dominant matmul inputs (f32 accumulation).
    np.testing.assert_allclose(np.asarray(out), np.asarray(ref), rtol=1e-2, atol=1e-2)

    # 2) using_emb_action_as_v=True branch (condition_hidden as the score vector).
    out_e = jax.block_until_ready(
        jax.jit(functools.partial(conditioned_attn, using_emb_action_as_v=True))(
            gh, cond, enc, params))
    ref_e = conditioned_attn_ref(gh, cond, enc, params, using_emb_action_as_v=True)
    np.testing.assert_allclose(np.asarray(out_e), np.asarray(ref_e), rtol=1e-2, atol=2e-2)

    # 3) Tiled + ragged-T path: force tile_t=128 over T=320 (last block clipped).
    B2, T2, H2 = 2, 320, 128
    gh2, cond2, enc2, params2 = _make_inputs(B2, T2, H2, key1)
    out2 = jax.block_until_ready(
        jax.jit(functools.partial(conditioned_attn, tile_t=128))(gh2, cond2, enc2, params2))
    ref2 = conditioned_attn_ref(gh2, cond2, enc2, params2)
    np.testing.assert_allclose(np.asarray(out2), np.asarray(ref2), rtol=1e-2, atol=2e-2)

    print("KERNEL_OK")
</pallas_src>

<mosaic_0001>
module attributes {stable_mosaic.version = 11 : i64} {
  func.func @conditioned_attn_kernel(%arg0: i32, %arg1: i32, %arg2: memref<1x1x32xf32, #tpu.memory_space<vmem>>, %arg3: memref<1x8x32xf32, #tpu.memory_space<vmem>>, %arg4: memref<32x32xbf16, #tpu.memory_space<vmem>>, %arg5: memref<1x1x32xf32, #tpu.memory_space<vmem>>, %arg6: memref<1x1x8xf32, #tpu.memory_space<vmem>>) attributes {dimension_semantics = [#tpu.dimension_semantics<parallel>, #tpu.dimension_semantics<parallel>], iteration_bounds = array<i64: 2, 1>, scalar_prefetch = 0 : i64, scratch_operands = 0 : i64, tpu.core_type = #tpu.core_type<tc>, window_params = [{transform_indices = @transform_0, window_bounds = array<i64: 1, 1, 32>}, {transform_indices = @transform_1, window_bounds = array<i64: 1, 8, 32>}, {pipeline_mode = #tpu.pipeline_mode<synchronous>, transform_indices = @transform_2, window_bounds = array<i64: 32, 32>}, {pipeline_mode = #tpu.pipeline_mode<synchronous>, transform_indices = @transform_3, window_bounds = array<i64: 1, 1, 32>}, {transform_indices = @transform_4, window_bounds = array<i64: 1, 1, 8>}]} {
    %c0 = arith.constant 0 : index
    %c0_0 = arith.constant 0 : index
    %c0_1 = arith.constant 0 : index
    %0 = vector.load %arg3[%c0, %c0_0, %c0_1] : memref<1x8x32xf32, #tpu.memory_space<vmem>>, vector<1x8x32xf32>
    %1 = vector.shape_cast %0 : vector<1x8x32xf32> to vector<8x32xf32>
    %2 = arith.truncf %1 : vector<8x32xf32> to vector<8x32xbf16>
    %c0_2 = arith.constant 0 : index
    %c0_3 = arith.constant 0 : index
    %3 = vector.load %arg4[%c0_2, %c0_3] : memref<32x32xbf16, #tpu.memory_space<vmem>>, vector<32x32xbf16>
    %cst = arith.constant dense<0.000000e+00> : vector<8x32xf32>
    %4 = tpu.matmul %2, %3, %cst {dimension_numbers = #tpu.dot_dimension_numbers<[1], [0], [0], [1], [0, 0, 1, 1], [], []>} : vector<8x32xbf16>, vector<32x32xbf16>, vector<8x32xf32> -> vector<8x32xf32>
    %c0_4 = arith.constant 0 : index
    %c0_5 = arith.constant 0 : index
    %c0_6 = arith.constant 0 : index
    %5 = vector.load %arg2[%c0_4, %c0_5, %c0_6] : memref<1x1x32xf32, #tpu.memory_space<vmem>>, vector<1x1x32xf32>
    %6 = vector.shape_cast %5 : vector<1x1x32xf32> to vector<1x32xf32>
    %7 = vector.broadcast %6 : vector<1x32xf32> to vector<8x32xf32>
    %8 = arith.addf %4, %7 : vector<8x32xf32>
    %9 = math.tanh %8 : vector<8x32xf32>
    %c0_7 = arith.constant 0 : index
    %c0_8 = arith.constant 0 : index
    %c0_9 = arith.constant 0 : index
    %10 = vector.load %arg5[%c0_7, %c0_8, %c0_9] : memref<1x1x32xf32, #tpu.memory_space<vmem>>, vector<1x1x32xf32>
    %11 = vector.shape_cast %10 : vector<1x1x32xf32> to vector<1x32xf32>
    %cst_10 = arith.constant dense<0.000000e+00> : vector<1x8xf32>
    %12 = tpu.matmul %11, %9, %cst_10 {dimension_numbers = #tpu.dot_dimension_numbers<[1], [1], [0], [0], [0, 0, 1, 0], [], []>} : vector<1x32xf32>, vector<8x32xf32>, vector<1x8xf32> -> vector<1x8xf32>
    %c0_11 = arith.constant 0 : index
    %c0_12 = arith.constant 0 : index
    %c0_13 = arith.constant 0 : index
    %13 = vector.load %arg6[%c0_11, %c0_12, %c0_13] : memref<1x1x8xf32, #tpu.memory_space<vmem>>, vector<1x1x8xf32>
    %14 = vector.shape_cast %13 : vector<1x1x8xf32> to vector<1x8xf32>
    %15 = vector.shape_cast %12 : vector<1x8xf32> to vector<1x1x8xf32>
    tpu.vector_store %arg6[%c0_11, %c0_12, %c0_13], %15 {strides = array<i32>} : memref<1x1x8xf32, #tpu.memory_space<vmem>>, vector<1x1x8xf32>,
    return
  }
  func.func @transform_0(%arg0: i32, %arg1: i32) -> (i32, i32, i32) {
    %c0_i32 = arith.constant 0 : i32
    %c0_i32_0 = arith.constant 0 : i32
    %c0_i32_1 = arith.constant 0 : i32
    return %arg0, %c0_i32, %c0_i32_0 : i32, i32, i32
  }
  func.func @transform_1(%arg0: i32, %arg1: i32) -> (i32, i32, i32) {
    %c0_i32 = arith.constant 0 : i32
    %c0_i32_0 = arith.constant 0 : i32
    return %arg0, %arg1, %c0_i32 : i32, i32, i32
  }
  func.func @transform_2(%arg0: i32, %arg1: i32) -> (i32, i32) {
    %c0_i32 = arith.constant 0 : i32
    %c0_i32_0 = arith.constant 0 : i32
    %c0_i32_1 = arith.constant 0 : i32
    return %c0_i32, %c0_i32_0 : i32, i32
  }
  func.func @transform_3(%arg0: i32, %arg1: i32) -> (i32, i32, i32) {
    %c0_i32 = arith.constant 0 : i32
    %c0_i32_0 = arith.constant 0 : i32
    %c0_i32_1 = arith.constant 0 : i32
    %c0_i32_2 = arith.constant 0 : i32
    return %c0_i32, %c0_i32_0, %c0_i32_1 : i32, i32, i32
  }
  func.func @transform_4(%arg0: i32, %arg1: i32) -> (i32, i32, i32) {
    %c0_i32 = arith.constant 0 : i32
    %c0_i32_0 = arith.constant 0 : i32
    return %arg0, %c0_i32, %arg1 : i32, i32, i32
  }
}

</mosaic_0001>

<llo_original>
// kernel: conditioned_attn.1
$region0: #{conditioned_attn.1}
  #allocation0 [shape = 'u32[]', space=smem, size = 0x4, offset = 0x4, fixed_abs, tag = 'smem constant byte address 0x4 - core index']
  #allocation1 [shape = 'u32[144,128]{1,0:T(1,128)}', space=vmem, size = 0x12000, scoped, tag = 'internal scratch']
  %s0 = inlined_call_operand.vmem [shape: f32[2,1,32], index: 0, kind: input, shape index: {}]
  %s1 = inlined_call_operand.vmem [shape: f32[2,8,32], index: 1, kind: input, shape index: {}]
  %s2 = inlined_call_operand.vmem [shape: bf16[32,32], index: 2, kind: input, shape index: {}]
  %s3 = inlined_call_operand.vmem [shape: f32[1,1,32], index: 3, kind: input, shape index: {}]
  %s4 = inlined_call_operand.hbm [shape: f32[2,1,8], index: 4, kind: output, shape index: {}]
  %s5 = sld [smem:[#allocation0]]
  $region49: #{conditioned_attn.1} parent=0
    _
  %s7 = ssub.s32 1, %s5
  %s8 = scalar_select 0, %s7, %s5
  $region1: #{conditioned_attn.1} parent=0
    #allocation2 [shape = 'u8[1024]{0}', space=vmem, size = 0x400, scoped, tag = 'output window, operand 0']
    #allocation3 [shape = 's32[2]{0}', space=sflag, size = 0x8, scoped, tag = 'scoped memory for conditioned_attn.1']
    %9 = vsyncpa [#allocation3], 0
    %s10 = scalar_lea.sflag [#allocation3], 1
    %11 = vsyncpa %s10, 0
    loop: start=0, step=1, limit=4
    $region2: #{conditioned_attn.1} parent=1 // loop_pre_header
      _
    $region3: #{conditioned_attn.1} parent=1 // loop_header
      %s13 = sphi 0, %s17
      %p14 = scmp.ge.s32.totalorder %s13, 4
      %s20 = sphi 0, %s32
      %s21 = sphi 0, %s28
      %s22 = sphi 0, %s20
      %s23 = sphi 0, %s21
      %s24 = sphi 0, %s22
      %s25 = sphi 0, %s23
      %s35 = sphi 0, %s37
      %s38 = sphi 0, %s35
      %s39 = sphi 0, %s38
      %s55 = sphi 0, %s39
      %s63 = sphi 0, %s65
      %s66 = sphi 0, %s63
      %s67 = sphi 0, %s66
      %s83 = sphi 0, %s67
      %s87 = sphi 0, %s87
      %s89 = sphi 0, %s87
      %s90 = sphi 0, %s89
      %s104 = sphi 0, %s90
      %s108 = sphi 0, %s108
      %s110 = sphi 0, %s108
      %s111 = sphi 0, %s110
      %s125 = sphi 0, %s111
      %s133 = sphi 0, %s135
      %s136 = sphi 0, %s133
      %s137 = sphi 0, %s136
      %s153 = sphi 0, %s137
    $region4: #{conditioned_attn.1} parent=1 // loop_header_branch
      %16 = sbr.rel (%p14) target = $region8
    $region5: #{conditioned_attn.1} parent=1 // loop_body
      %s18 = ssub.s32 %s13, 1
      %s19 = ssub.s32 %s13, 2
      %s26 = sadd.s32 1, %s21
      %p27 = scmp.ge.s32.totalorder %s26, 1
      %s28 = scalar_select %p27, 0, %s26
      %s29 = sadd.s32 1, %s20
      %s30 = scalar_select %p27, %s29, %s20
      %p31 = scmp.ge.s32.totalorder %s30, 2
      %s32 = scalar_select %p31, 0, %s30
      %s33 = ssub.s32 %s20, %s32
      %p34 = scmp.eq.s32.totalorder %s33, 0
      %s36 = sadd.s32 %s35, 1
      %s37 = scalar_select %p34, %s35, %s36
      %p40 = pneg %p34
      %p41 = scmp.eq.s32.totalorder %s13, 1
      %p42 = por %p40, %p41
      %p43 = scmp.ne.s32.totalorder %s35, %s38
      %p44 = scmp.eq.s32.totalorder %s13, 0
      %p45 = por %p43, %p44
      %p46 = scmp.ne.s32.totalorder %s35, %s38
      %p47 = scmp.eq.s32.totalorder %s18, 1
      %p48 = por %p46, %p47
      %p49 = scmp.ne.s32.totalorder %s38, %s39
      %p50 = scmp.eq.s32.totalorder %s18, 0
      %p51 = por %p49, %p50
      %p52 = scmp.ne.s32.totalorder %s38, %s39
      %p53 = scmp.eq.s32.totalorder %s19, 1
      %p54 = por %p52, %p53
      %p56 = scmp.ne.s32.totalorder %s39, %s55
      %p57 = scmp.eq.s32.totalorder %s19, 0
      %p58 = por %p56, %p57
      %s59 = ssub.s32 %s20, %s32
      %s60 = ssub.s32 %s21, %s28
      %s61 = sor.u32 %s59, %s60
      %p62 = scmp.eq.s32.totalorder %s61, 0
      %s64 = sadd.s32 %s63, 1
      %s65 = scalar_select %p62, %s63, %s64
      %p68 = pneg %p62
      %p69 = scmp.eq.s32.totalorder %s13, 1
      %p70 = por %p68, %p69
      %p71 = scmp.ne.s32.totalorder %s63, %s66
      %p72 = scmp.eq.s32.totalorder %s13, 0
      %p73 = por %p71, %p72
      %p74 = scmp.ne.s32.totalorder %s63, %s66
      %p75 = scmp.eq.s32.totalorder %s18, 1
      %p76 = por %p74, %p75
      %p77 = scmp.ne.s32.totalorder %s66, %s67
      %p78 = scmp.eq.s32.totalorder %s18, 0
      %p79 = por %p77, %p78
      %p80 = scmp.ne.s32.totalorder %s66, %s67
      %p81 = scmp.eq.s32.totalorder %s19, 1
      %p82 = por %p80, %p81
      %p84 = scmp.ne.s32.totalorder %s67, %s83
      %p85 = scmp.eq.s32.totalorder %s19, 0
      %p86 = por %p84, %p85
      %s88 = sadd.s32 %s87, 1
      %p91 = scmp.eq.s32.totalorder %s13, 1
      %p92 = scmp.ne.s32.totalorder %s87, %s89
      %p93 = scmp.eq.s32.totalorder %s13, 0
      %p94 = por %p92, %p93
      %p95 = scmp.ne.s32.totalorder %s87, %s89
      %p96 = scmp.eq.s32.totalorder %s18, 1
      %p97 = por %p95, %p96
      %p98 = scmp.ne.s32.totalorder %s89, %s90
      %p99 = scmp.eq.s32.totalorder %s18, 0
      %p100 = por %p98, %p99
      %p101 = scmp.ne.s32.totalorder %s89, %s90
      %p102 = scmp.eq.s32.totalorder %s19, 1
      %p103 = por %p101, %p102
      %p105 = scmp.ne.s32.totalorder %s90, %s104
      %p106 = scmp.eq.s32.totalorder %s19, 0
      %p107 = por %p105, %p106
      %s109 = sadd.s32 %s108, 1
      %p112 = scmp.eq.s32.totalorder %s13, 1
      %p113 = scmp.ne.s32.totalorder %s108, %s110
      %p114 = scmp.eq.s32.totalorder %s13, 0
      %p115 = por %p113, %p114
      %p116 = scmp.ne.s32.totalorder %s108, %s110
      %p117 = scmp.eq.s32.totalorder %s18, 1
      %p118 = por %p116, %p117
      %p119 = scmp.ne.s32.totalorder %s110, %s111
      %p120 = scmp.eq.s32.totalorder %s18, 0
      %p121 = por %p119, %p120
      %p122 = scmp.ne.s32.totalorder %s110, %s111
      %p123 = scmp.eq.s32.totalorder %s19, 1
      %p124 = por %p122, %p123
      %p126 = scmp.ne.s32.totalorder %s111, %s125
      %p127 = scmp.eq.s32.totalorder %s19, 0
      %p128 = por %p126, %p127
      %s129 = ssub.s32 %s20, %s32
      %s130 = ssub.s32 %s21, %s28
      %s131 = sor.u32 %s129, %s130
      %p132 = scmp.eq.s32.totalorder %s131, 0
      %s134 = sadd.s32 %s133, 1
      %s135 = scalar_select %p132, %s133, %s134
      %p138 = pneg %p132
      %p139 = scmp.eq.s32.totalorder %s13, 1
      %p140 = por %p138, %p139
      %p141 = scmp.ne.s32.totalorder %s133, %s136
      %p142 = scmp.eq.s32.totalorder %s13, 0
      %p143 = por %p141, %p142
      %p144 = scmp.ne.s32.totalorder %s133, %s136
      %p145 = scmp.eq.s32.totalorder %s18, 1
      %p146 = por %p144, %p145
      %p147 = scmp.ne.s32.totalorder %s136, %s137
      %p148 = scmp.eq.s32.totalorder %s18, 0
      %p149 = por %p147, %p148
      %p150 = scmp.ne.s32.totalorder %s136, %s137
      %p151 = scmp.eq.s32.totalorder %s19, 1
      %p152 = por %p150, %p151
      %p154 = scmp.ne.s32.totalorder %s137, %s153
      %p155 = scmp.eq.s32.totalorder %s19, 0
      %p156 = por %p154, %p155
      %p157 = scmp.le.s32.totalorder 1, %s13
      %p158 = scmp.lt.s32.totalorder %s13, 3
      %p159 = pnand %p157, %p158
      %p160 = pneg %p159
      // Predicated region
      $region9: #{conditioned_attn.1} parent=5 // pred_check
        _
      $region10: #{conditioned_attn.1} parent=5 // pred_check_branch
        %162 = sbr.rel (%p159) target = $region12
      $region11: #{conditioned_attn.1} parent=5 // pred_region
        %s163 = ssub.s32 %s13, 1
        // Predicated region
        $region13: #{conditioned_attn.1} parent=11 // pred_check
          %p164 = pneg %p100
        $region14: #{conditioned_attn.1} parent=11 // pred_check_branch
          %166 = sbr.rel (%p164) target = $region16
        $region15: #{conditioned_attn.1} parent=11 // pred_region
          _
        $region16: #{conditioned_attn.1} parent=11 // pred_fallthru
          _
        // Predicated region
        $region17: #{conditioned_attn.1} parent=11 // pred_check
          %p167 = pneg %p121
        $region18: #{conditioned_attn.1} parent=11 // pred_check_branch
          %169 = sbr.rel (%p167) target = $region20
        $region19: #{conditioned_attn.1} parent=11 // pred_region
          _
        $region20: #{conditioned_attn.1} parent=11 // pred_fallthru
          _
      $region12: #{conditioned_attn.1} parent=5 // pred_fallthru
        _
      %p170 = scmp.lt.s32.totalorder %s13, 2
      // Predicated region
      $region21: #{conditioned_attn.1} parent=5 // pred_check
        %p171 = pneg %p170
      $region22: #{conditioned_attn.1} parent=5 // pred_check_branch
        %173 = sbr.rel (%p171) target = $region24
      $region23: #{conditioned_attn.1} parent=5 // pred_region
        // Predicated region
        $region25: #{conditioned_attn.1} parent=23 // pred_check
          %p174 = pneg %p45
        $region26: #{conditioned_attn.1} parent=23 // pred_check_branch
          %176 = sbr.rel (%p174) target = $region28
        $region27: #{conditioned_attn.1} parent=23 // pred_region
          %p177 = scmp.lt.s32.totalorder %s20, 1
          %s178 = scalar_select %p177, %s20, 1
          %s179 = scalar_lea.vmem %s0, %s178
        $region28: #{conditioned_attn.1} parent=23 // pred_fallthru
          _
        // Predicated region
        $region29: #{conditioned_attn.1} parent=23 // pred_check
          %p180 = pneg %p73
        $region30: #{conditioned_attn.1} parent=23 // pred_check_branch
          %182 = sbr.rel (%p180) target = $region32
        $region31: #{conditioned_attn.1} parent=23 // pred_region
          %p183 = scmp.lt.s32.totalorder %s20, 1
          %s184 = scalar_select %p183, %s20, 1
          %p185 = scmp.lt.s32.totalorder %s21, 0
          %s186 = scalar_select %p185, %s21, 0
          %s187 = sadd.s32 %s186, %s184
          %s188 = smul.addr %s187, 8
          %s189 = scalar_lea.vmem %s1, %s188
        $region32: #{conditioned_attn.1} parent=23 // pred_fallthru
          _
      $region24: #{conditioned_attn.1} parent=5 // pred_fallthru
        _
      %p190 = scmp.le.s32.totalorder 1, %s13
      %p191 = scmp.lt.s32.totalorder %s13, 3
      %p192 = pnand %p190, %p191
      %p193 = pneg %p192
      // Predicated region
      $region33: #{conditioned_attn.1} parent=5 // pred_check
        _
      $region34: #{conditioned_attn.1} parent=5 // pred_check_branch
        %195 = sbr.rel (%p192) target = $region36
      $region35: #{conditioned_attn.1} parent=5 // pred_region
        %s196 = ssub.s32 %s13, 1
        %p197 = scmp.lt.s32.totalorder %s22, 1
        %s198 = scalar_select %p197, %s22, 1
        %s199 = scalar_lea.vmem %s0, %s198
        %p200 = pneg %p51
        %p201 = pneg %p48
        %p202 = scmp.lt.s32.totalorder %s22, 1
        %s203 = scalar_select %p202, %s22, 1
        %p204 = scmp.lt.s32.totalorder %s23, 0
        %s205 = scalar_select %p204, %s23, 0
        %s206 = sadd.s32 %s205, %s203
        %s207 = smul.addr %s206, 8
        %s208 = scalar_lea.vmem %s1, %s207
        %p209 = pneg %p79
        %p210 = pneg %p76
        %p211 = pneg %p100
        %p212 = pneg %p97
        %p213 = pneg %p121
        %p214 = pneg %p118
        %p215 = pneg %p149
        %p216 = pneg %p146
        %s217 = sand.u32 %s136, 1
        %s218 = scalar_lea.sflag [#allocation3], %s217
        %s219 = sand.u32 %s136, 1
        %s220 = scalar_lea.vmem [#allocation2], %s219
        %p221 = scmp.lt.s32.totalorder %s22, 1
        %s222 = scalar_select %p221, %s22, 1
        %s223 = scalar_lea.vmem %s0, %s222
        %p224 = scmp.lt.s32.totalorder %s22, 1
        %s225 = scalar_select %p224, %s22, 1
        %p226 = scmp.lt.s32.totalorder %s23, 0
        %s227 = scalar_select %p226, %s23, 0
        %s228 = sadd.s32 %s227, %s225
        %s229 = smul.addr %s228, 8
        %s230 = scalar_lea.vmem %s1, %s229
        %v232 = vld [vmem:[%s230] sm:$0xff]
        %v233 = vpack.c.bf16 %v232, %v232
        %v234 = vld [vmem:[%s2] sm:$0xf]
        %v235 = vld [vmem:[%s2 + $0x4] sm:$0xf]
        %v236 = vld [vmem:[%s2 + $0x8] sm:$0xf]
        %v237 = vld [vmem:[%s2 + $0xc] sm:$0xf]
        %v238 = vld [vmem:[%s223] sm:$0x1]
        %v240 = vlaneseq
        %v241 = vshrl.u32 %v240, 7
        %v242 = vsub.s32 0, %v241
        %v243 = vrot.slane %v238, %v242
        %v249 = vunpack.c.l.b16 %v234
        %v250 = vunpack.c.l.b16 %v235
        %v251 = vunpack.c.l.b16 %v236
        %v252 = vunpack.c.l.b16 %v237
        %v253 = vpack.c.b16 %v250, %v249
        %v254 = vpack.c.b16 %v252, %v251
        %vm257 = vcmask 261120
        %v259 = vsel %vm257, %v233, 0
        %261 = vmatprep.subr.bf16.mxu0 0
        %262 = vmatpush1.bf16.msra.mxu0 %v253
        %263 = vmatprep.subr.bf16.mxu0 0
        %264 = vmatpush1.bf16.msra.mxu0 %v254
        %265 = vmatprep.subr.bf16.mxu0 0
        %266 = vmatpush1.bf16.msra.mxu0 0
        %267 = vmatprep.subr.bf16.mxu0 0
        %268 = vmatpush1.bf16.msra.mxu0 0
        %269 = vmatprep.subr.bf16.mxu0 0
        %270 = vmatpush1.bf16.msra.mxu0 0
        %271 = vmatprep.subr.bf16.mxu0 0
        %272 = vmatpush1.bf16.msra.mxu0 0
        %273 = vmatprep.subr.bf16.mxu0 0
        %274 = vmatpush1.bf16.msra.mxu0 0
        %275 = vmatprep.subr.bf16.mxu0 0
        %276 = vmatpush1.bf16.msra.mxu0 0
        %277 = vmatprep.subr.bf16.mxu0 0
        %278 = vmatpush1.bf16.msra.mxu0 0
        %279 = vmatprep.subr.bf16.mxu0 0
        %280 = vmatpush1.bf16.msra.mxu0 0
        %281 = vmatprep.subr.bf16.mxu0 0
        %282 = vmatpush1.bf16.msra.mxu0 0
        %283 = vmatprep.subr.bf16.mxu0 0
        %284 = vmatpush1.bf16.msra.mxu0 0
        %285 = vmatprep.subr.bf16.mxu0 0
        %286 = vmatpush1.bf16.msra.mxu0 0
        %287 = vmatprep.subr.bf16.mxu0 0
        %288 = vmatpush1.bf16.msra.mxu0 0
        %289 = vmatprep.subr.bf16.mxu0 0
        %290 = vmatpush1.bf16.msra.mxu0 0
        %291 = vmatprep.subr.bf16.mxu0 0
        %292 = vmatpush1.bf16.msra.mxu0 0
        %293 = vmatprep.mubr.bf16.mxu0 0
        %294 = vmatmul.mubr.bf16.gmra.mrb[0].mxu0 %v259
        %v295 = vpop.f32.mrb[0].mxu0
        %v296 = vadd.f32 %v243, %v295
        %v297 = vpop.f32.mrb[0].mxu0
        %v298 = vpop.f32.mrb[0].mxu0
        %v299 = vpop.f32.mrb[0].mxu0
        %300 = vdwg.mxu0
        %v301 = vtanh.pop %v296
        %v302 = vld [vmem:[%s3] sm:$0x1]
        %v304 = vsel %vm257, %v302, 0
        %v307 = vsel %vm257, %v301, 0
        %309 = vmatprep.subr.mxu0 0.0
        %310 = vmatpush1.xpose.msra.mxu0 %v307
        %311 = vmatprep.subr.mxu0 0.0
        %312 = vmatpush1.xpose.msra.mxu0 0.0
        %313 = vmatprep.subr.mxu0 0.0
        %314 = vmatpush1.xpose.msra.mxu0 0.0
        %315 = vmatprep.subr.mxu0 0.0
        %316 = vmatpush1.xpose.msra.mxu0 0.0
        %317 = vmatprep.subr.mxu0 0.0
        %318 = vmatpush1.xpose.msra.mxu0 0.0
        %319 = vmatprep.subr.mxu0 0.0
        %320 = vmatpush1.xpose.msra.mxu0 0.0
        %321 = vmatprep.subr.mxu0 0.0
        %322 = vmatpush1.xpose.msra.mxu0 0.0
        %323 = vmatprep.subr.mxu0 0.0
        %324 = vmatpush1.xpose.msra.mxu0 0.0
        %325 = vmatprep.subr.mxu0 0.0
        %326 = vmatpush1.xpose.msra.mxu0 0.0
        %327 = vmatprep.subr.mxu0 0.0
        %328 = vmatpush1.xpose.msra.mxu0 0.0
        %329 = vmatprep.subr.mxu0 0.0
        %330 = vmatpush1.xpose.msra.mxu0 0.0
        %331 = vmatprep.subr.mxu0 0.0
        %332 = vmatpush1.xpose.msra.mxu0 0.0
        %333 = vmatprep.subr.mxu0 0.0
        %334 = vmatpush1.xpose.msra.mxu0 0.0
        %335 = vmatprep.subr.mxu0 0.0
        %336 = vmatpush1.xpose.msra.mxu0 0.0
        %337 = vmatprep.subr.mxu0 0.0
        %338 = vmatpush1.xpose.msra.mxu0 0.0
        %339 = vmatprep.subr.mxu0 0.0
        %340 = vmatpush1.xpose.msra.mxu0 0.0
        %341 = vmatprep.subr.mxu0 0.0
        %342 = vmatpush1.xpose.msra.mxu0 0.0
        %343 = vmatprep.subr.mxu0 0.0
        %344 = vmatpush1.xpose.msra.mxu0 0.0
        %345 = vmatprep.subr.mxu0 0.0
        %346 = vmatpush1.xpose.msra.mxu0 0.0
        %347 = vmatprep.subr.mxu0 0.0
        %348 = vmatpush1.xpose.msra.mxu0 0.0
        %349 = vmatprep.subr.mxu0 0.0
        %350 = vmatpush1.xpose.msra.mxu0 0.0
        %351 = vmatprep.subr.mxu0 0.0
        %352 = vmatpush1.xpose.msra.mxu0 0.0
        %353 = vmatprep.subr.mxu0 0.0
        %354 = vmatpush1.xpose.msra.mxu0 0.0
        %355 = vmatprep.subr.mxu0 0.0
        %356 = vmatpush1.xpose.msra.mxu0 0.0
        %357 = vmatprep.subr.mxu0 0.0
        %358 = vmatpush1.xpose.msra.mxu0 0.0
        %359 = vmatprep.subr.mxu0 0.0
        %360 = vmatpush1.xpose.msra.mxu0 0.0
        %361 = vmatprep.subr.mxu0 0.0
        %362 = vmatpush1.xpose.msra.mxu0 0.0
        %363 = vmatprep.subr.mxu0 0.0
        %364 = vmatpush1.xpose.msra.mxu0 0.0
        %365 = vmatprep.subr.mxu0 0.0
        %366 = vmatpush1.xpose.msra.mxu0 0.0
        %367 = vmatprep.subr.mxu0 0.0
        %368 = vmatpush1.xpose.msra.mxu0 0.0
        %369 = vmatprep.subr.mxu0 0.0
        %370 = vmatpush1.xpose.msra.mxu0 0.0
        %371 = vmatprep.subr.mxu0 0.0
        %372 = vmatpush1.xpose.msra.mxu0 0.0
        %373 = vmatprep.mubr.f32.mxu0 0.0
        %374 = vmatmul.mubr.f32.gmra.mrb[0].mxu0 %v304
        %v375 = vpop.f32.mrb[0].mxu0
        %v376 = vadd.f32 0.0, %v375
        %v377 = vpop.f32.mrb[0].mxu0
        %378 = vdwg.mxu0
        %vm379 = vcmask 57344
        %380 = vst.msk [vmem:[%s220] sm:$0x1] %vm379, %v376
        %s381 = sand.u32 %s136, 1
        %s382 = scalar_lea.sflag [#allocation3], %s381
        %s383 = sand.u32 %s136, 1
        %s384 = scalar_lea.vmem [#allocation2], %s383
        // Predicated region
        $region37: #{conditioned_attn.1} parent=35 // pred_check
          %p385 = pneg %p146
        $region38: #{conditioned_attn.1} parent=35 // pred_check_branch
          %387 = sbr.rel (%p385) target = $region40
        $region39: #{conditioned_attn.1} parent=35 // pred_region
          %s389 = ssub.s32 16, 16
          %390 = vsyncadd %s382, %s389
          %s391 = sadd.s32 %s23, %s22
          %s392 = smul.addr %s391, 16
          %s393 = scalar_lea.hbm %s4, %s392
          %s395 = sshll.u32 %s384, 4
          %s396 = int_to_ptr.vmem [resolvable:$true] %s395
          %398 = dma.vmem_to_hbm [thread:$0]  %s396, 16, %s393, %s382
        $region40: #{conditioned_attn.1} parent=35 // pred_fallthru
          _
      $region36: #{conditioned_attn.1} parent=5 // pred_fallthru
        _
      %p399 = scmp.le.s32.totalorder 2, %s13
      // Predicated region
      $region41: #{conditioned_attn.1} parent=5 // pred_check
        %p400 = pneg %p399
      $region42: #{conditioned_attn.1} parent=5 // pred_check_branch
        %402 = sbr.rel (%p400) target = $region44
      $region43: #{conditioned_attn.1} parent=5 // pred_region
        %s403 = ssub.s32 %s13, 2
        // Predicated region
        $region45: #{conditioned_attn.1} parent=43 // pred_check
          %p404 = pneg %p152
        $region46: #{conditioned_attn.1} parent=43 // pred_check_branch
          %406 = sbr.rel (%p404) target = $region48
        $region47: #{conditioned_attn.1} parent=43 // pred_region
          %s407 = sand.u32 %s137, 1
          %s408 = scalar_lea.sflag [#allocation3], %s407
          %s409 = sand.u32 %s137, 1
          %s410 = scalar_lea.vmem [#allocation2], %s409
          %411 = dma.done %s408, 16
        $region48: #{conditioned_attn.1} parent=43 // pred_fallthru
          _
      $region44: #{conditioned_attn.1} parent=5 // pred_fallthru
        _
    $region6: #{conditioned_attn.1} parent=1 // loop_footer
      %s17 = sadd.s32 1, %s13
    $region7: #{conditioned_attn.1} parent=1 // loop_footer_branch
      %12 = sbr.rel target = $region3
    $region8: #{conditioned_attn.1} parent=1 // loop_exit
      _
    %412 = vsyncpa [#allocation3], 1
    %s413 = scalar_lea.sflag [#allocation3], 1
    %414 = vsyncpa %s413, 1

</llo_original>
